<compile_context>
chip_gen: v7x
topology: tpu7x:2x2x1
jax: 0.10.0
libtpu: 0.0.40
codegen_flags: <defaults>
</compile_context>

<pallas_src>
import functools

import jax
import jax.numpy as jnp
from jax.experimental import pallas as pl
from jax.experimental.pallas import tpu as pltpu


# ---------------------------------------------------------------------------
# Chip detection (never allowed to break compilation: everything has fallbacks)
# ---------------------------------------------------------------------------
def _chip_info():
    """Returns (generation, vmem_capacity_bytes, num_tensorcores)."""
    gen = 0
    try:
        kind = jax.devices()[0].device_kind.lower().replace(" ", "")
        for g in (7, 6, 5, 4):
            if f"v{g}" in kind or f"tpu{g}" in kind:
                gen = g
                break
    except Exception:
        gen = 0
    try:
        vmem_cap = int(pltpu.get_tpu_info().vmem_capacity_bytes)
    except Exception:
        # Conservative defaults: v7x has 64 MiB / TC, older gens have 128 MiB.
        vmem_cap = (64 << 20) if (gen >= 7 or gen == 0) else (128 << 20)
    num_cores = 2 if gen >= 7 else 1
    return gen, vmem_cap, num_cores


# ---------------------------------------------------------------------------
# Kernel
# ---------------------------------------------------------------------------
def _margin_loss_kernel(pos_ref, neg_ref, ones_ref, out_ref, acc_ref, *,
                        margin, upcast_f32, rows_total, tb, nblk, needs_mask):
    i = pl.program_id(1)                    # accumulation ("arbitrary") axis

    @pl.when(i == 0)
    def _():
        acc_ref[...] = jnp.zeros_like(acc_ref)

    if upcast_f32:
        # f32 chain (f32 inputs, or bf16 on chips without bf16 VALU).
        pos = pos_ref[...].astype(jnp.float32)
        neg = neg_ref[...].astype(jnp.float32)
        hinge = jnp.maximum(neg - pos + margin, 0.0)            # (tb, N) f32
        row_sums = jnp.dot(hinge, ones_ref[...],                 # MXU reduce
                           preferred_element_type=jnp.float32,
                           precision=jax.lax.Precision.HIGHEST)  # exact f32
    else:
        # Native bf16 chain (v6e/v7x): packed VALU, single implicit widening
        # happens inside the MXU which accumulates in f32.
        hinge = jnp.maximum(neg_ref[...] - pos_ref[...] + margin, 0.0)
        row_sums = jnp.dot(hinge, ones_ref[...],
                           preferred_element_type=jnp.float32)   # (tb, 1) f32

    if needs_mask:
        # Drop rows past the true batch size (partial last block and phantom
        # blocks of the last partition).  Select, not multiply: padded garbage
        # may be NaN/Inf.  Uses the *unclamped* block index so phantom blocks
        # (clamped to the last real block by the index_map) are fully dropped.
        p = pl.program_id(0)
        row0 = (p * nblk + i) * tb
        ridx = row0 + jax.lax.broadcasted_iota(jnp.int32, row_sums.shape, 0)
        row_sums = jnp.where(ridx < rows_total, row_sums, 0.0)

    acc_ref[...] += row_sums

    @pl.when(i == pl.num_programs(1) - 1)
    def _():
        # One lane-dense (1,128) store per partition; wrapper reads lane 0.
        out_ref[...] = jnp.full(out_ref.shape, jnp.sum(acc_ref[...]),
                                jnp.float32)


# ---------------------------------------------------------------------------
# Wrapper
# ---------------------------------------------------------------------------
def _choose_row_tile(rows_total, ncols, itemsize, target_block_bytes,
                     max_rows=2048):
    """Rows per block: ~target bytes, aligned to dtype-native sublane packing."""
    pack = max(8, 32 // max(1, itemsize))           # 8 f32 / 16 bf16 / 32 int8
    rows = target_block_bytes // max(1, ncols * itemsize)
    rows = max(pack, min(rows, max_rows))
    rows = (rows // pack) * pack
    if rows >= rows_total:
        return rows_total                           # full dim: always legal
    return rows


def margin_loss(pos_score, neg_score, margin: float, *,
                target_block_bytes: int | None = None,
                num_partials: int | None = None,
                force_pallas: bool = False):
    """Pallas equivalent of Margin_Loss.forward(pos_score, neg_score)."""
    # Match torch's broadcasting / type promotion semantics.
    if pos_score.shape != neg_score.shape:
        pos_score, neg_score = jnp.broadcast_arrays(pos_score, neg_score)
    if pos_score.dtype != neg_score.dtype:
        dt = jnp.promote_types(pos_score.dtype, neg_score.dtype)
        pos_score, neg_score = pos_score.astype(dt), neg_score.astype(dt)

    total = int(pos_score.size)
    itemsize = jnp.dtype(pos_score.dtype).itemsize

    # Tiny problems: plain XLA fusion beats any pallas_call fixed cost.
    if not force_pallas and total * itemsize < (64 << 10):
        return margin_loss_ref(pos_score, neg_score, margin)

    gen, vmem_cap, num_cores = _chip_info()

    # 2-D view; global mean => contiguous reshapes are free and legal.
    if pos_score.ndim != 2:
        pos2, neg2 = pos_score.reshape(1, -1), neg_score.reshape(1, -1)
    else:
        pos2, neg2 = pos_score, neg_score
    B, N = pos2.shape
    if N % 128 != 0 or N < 128:
        # Flatten to a lane-dense layout when possible (unmasked vld/vst).
        for w in (512, 256, 128):
            if total % w == 0:
                pos2, neg2 = pos2.reshape(total // w, w), neg2.reshape(total // w, w)
                B, N = total // w, w
                break

    # bf16 VALU exists on v6e/v7x; elsewhere compute the hinge in f32.
    upcast_f32 = not (pos2.dtype == jnp.bfloat16 and gen >= 6)
    compute_dtype = jnp.float32 if upcast_f32 else pos2.dtype

    # Per-generation VMEM budget.
    if target_block_bytes is None:
        target_block_bytes = (4 << 20) if gen >= 6 else (2 << 20)

    tb = _choose_row_tile(B, N, itemsize, target_block_bytes)
    nbtotal = pl.cdiv(B, tb)
    if num_partials is None:
        num_partials = num_cores           # 2 on v7x (one per TensorCore)
    P = max(1, min(int(num_partials), nbtotal))
    nblk = pl.cdiv(nbtotal, P)
    needs_mask = (P * nblk * tb != B)

    # VMEM estimate: double-buffered inputs + widened intermediates + acc.
    block_bytes = tb * N * itemsize
    f32_tile = tb * N * 4
    if upcast_f32 and itemsize < 4:
        inter = 3 * f32_tile               # pos_f32, neg_f32, hinge
    elif upcast_f32:
        inter = 2 * f32_tile               # diff + hinge
    else:
        inter = 2 * block_bytes            # bf16 intermediates
    est = 2 * 2 * block_bytes + inter + tb * 128 * 4 + (1 << 20)
    vmem_limit = int(min(vmem_cap * 3 // 4, max(32 << 20, 2 * est)))

    last_blk = nbtotal - 1

    def in_map(p_, i_):
        # Clamp phantom blocks of the last partition into range; their rows
        # are dropped by the mask (which uses the unclamped index).
        return (jnp.minimum(p_ * nblk + i_, last_blk), 0)

    ones = jnp.ones((N, 1), dtype=compute_dtype)   # resident MXU reduce vector

    kernel = functools.partial(
        _margin_loss_kernel,
        margin=float(margin), upcast_f32=upcast_f32,
        rows_total=B, tb=tb, nblk=nblk, needs_mask=needs_mask)

    out = pl.pallas_call(
        kernel,
        out_shape=jax.ShapeDtypeStruct((1, 128 * P), jnp.float32),
        grid_spec=pltpu.PrefetchScalarGridSpec(
            num_scalar_prefetch=0,
            grid=(P, nblk),
            in_specs=[
                pl.BlockSpec((tb, N), in_map),
                pl.BlockSpec((tb, N), in_map),
                pl.BlockSpec((N, 1), lambda p_, i_: (0, 0)),
            ],
            out_specs=pl.BlockSpec((1, 128), lambda p_, i_: (0, p_)),
            scratch_shapes=[pltpu.VMEM((tb, 1), jnp.float32)],
        ),
        compiler_params=pltpu.CompilerParams(
            dimension_semantics=("parallel", "arbitrary"),
            vmem_limit_bytes=vmem_limit,
        ),
        cost_estimate=pl.CostEstimate(
            flops=6 * total, transcendentals=0,
            bytes_accessed=2 * total * itemsize + N * itemsize + 128 * P * 4),
    )(pos2, neg2, ones)

    partials = out.reshape(P, 128)[:, 0]           # lane 0 of each partition
    return jnp.sum(partials) * (1.0 / float(total))


def margin_loss_ref(pos_score, neg_score, margin: float):
    """Pure-JAX reference (f32 accumulation) for verification."""
    pos = pos_score.astype(jnp.float32)
    neg = neg_score.astype(jnp.float32)
    return jnp.mean(jnp.maximum(neg - pos + margin, 0.0))


if __name__ == "__main__":
    MARGIN = 6.0  # "args.margin" of the KG model — deterministic, set in-script.

    key = jax.random.PRNGKey(0)
    k1, k2, k3, k4, k5, k6 = jax.random.split(key, 6)

    # --- small f32 case: single block, single partition ----------------------
    pos_f32 = jax.random.normal(k1, (8, 128), dtype=jnp.float32) + 2.0
    neg_f32 = jax.random.normal(k2, (8, 128), dtype=jnp.float32) - 2.0
    loss_small = jax.block_until_ready(
        margin_loss(pos_f32, neg_f32, MARGIN, force_pallas=True))
    ref_small = margin_loss_ref(pos_f32, neg_f32, MARGIN)
    assert jnp.allclose(loss_small, ref_small, rtol=1e-4, atol=1e-5), (
        loss_small, ref_small)

    # --- bf16 case: multiple blocks, forced 2 partitions, partial last block -
    pos_bf16 = (jax.random.normal(k3, (1000, 256), dtype=jnp.float32) + 1.0
                ).astype(jnp.bfloat16)
    neg_bf16 = (jax.random.normal(k4, (1000, 256), dtype=jnp.float32) - 1.0
                ).astype(jnp.bfloat16)
    # tb=128 -> 8 row blocks split over 2 partitions (correct on 1-core chips,
    # one per TensorCore on v7x); last block has 104 valid rows -> masked.
    loss_big = margin_loss(pos_bf16, neg_bf16, MARGIN,
                           target_block_bytes=64 << 10, num_partials=2,
                           force_pallas=True)
    loss_big = jax.block_until_ready(loss_big)
    ref_big = margin_loss_ref(pos_bf16, neg_bf16, MARGIN)
    assert jnp.allclose(loss_big, ref_big, rtol=1e-3, atol=1e-3), (
        loss_big, ref_big)

    # --- odd N (not a multiple of 128): exercises the lane-dense flatten -----
    pos_odd = jax.random.normal(k5, (96, 200), dtype=jnp.float32) + 1.0
    neg_odd = jax.random.normal(k6, (96, 200), dtype=jnp.float32) - 1.0
    loss_odd = jax.block_until_ready(
        margin_loss(pos_odd, neg_odd, MARGIN, force_pallas=True))
    ref_odd = margin_loss_ref(pos_odd, neg_odd, MARGIN)
    assert jnp.allclose(loss_odd, ref_odd, rtol=1e-4, atol=1e-5), (
        loss_odd, ref_odd)

    print("KERNEL_OK")
</pallas_src>

<mosaic_0001>
module attributes {stable_mosaic.version = 11 : i64} {
  func.func @_margin_loss_kernel(%arg0: i32, %arg1: i32, %arg2: memref<8x128xf32, #tpu.memory_space<vmem>>, %arg3: memref<8x128xf32, #tpu.memory_space<vmem>>, %arg4: memref<128x1xf32, #tpu.memory_space<vmem>>, %arg5: memref<1x128xf32, #tpu.memory_space<vmem>>, %arg6: memref<8x1xf32, #tpu.memory_space<vmem>>) attributes {dimension_semantics = [#tpu.dimension_semantics<parallel>, #tpu.dimension_semantics<arbitrary>], iteration_bounds = array<i64: 1, 1>, scalar_prefetch = 0 : i64, scratch_operands = 1 : i64, tpu.core_type = #tpu.core_type<tc>, window_params = [{transform_indices = @transform_0, window_bounds = array<i64: 8, 128>}, {transform_indices = @transform_1, window_bounds = array<i64: 8, 128>}, {pipeline_mode = #tpu.pipeline_mode<synchronous>, transform_indices = @transform_2, window_bounds = array<i64: 128, 1>}, {transform_indices = @transform_3, window_bounds = array<i64: 1, 128>}]} {
    %c0_i32 = arith.constant 0 : i32
    %0 = arith.cmpi eq, %arg1, %c0_i32 : i32
    %1 = arith.extui %0 : i1 to i32
    %c0_i32_0 = arith.constant 0 : i32
    %2 = arith.cmpi ne, %1, %c0_i32_0 : i32
    scf.if %2 {
      %cst_14 = arith.constant 0.000000e+00 : f32
      %18 = vector.broadcast %cst_14 : f32 to vector<8x1xf32>
      %c0_15 = arith.constant 0 : index
      %c0_16 = arith.constant 0 : index
      %19 = vector.load %arg6[%c0_15, %c0_16] : memref<8x1xf32, #tpu.memory_space<vmem>>, vector<8x1xf32>
      tpu.vector_store %arg6[%c0_15, %c0_16], %18 {strides = array<i32>} : memref<8x1xf32, #tpu.memory_space<vmem>>, vector<8x1xf32>,
    } else {
    }
    %c0 = arith.constant 0 : index
    %c0_1 = arith.constant 0 : index
    %3 = vector.load %arg2[%c0, %c0_1] : memref<8x128xf32, #tpu.memory_space<vmem>>, vector<8x128xf32>
    %c0_2 = arith.constant 0 : index
    %c0_3 = arith.constant 0 : index
    %4 = vector.load %arg3[%c0_2, %c0_3] : memref<8x128xf32, #tpu.memory_space<vmem>>, vector<8x128xf32>
    %5 = arith.subf %4, %3 : vector<8x128xf32>
    %cst = arith.constant 6.000000e+00 : f32
    %6 = vector.broadcast %cst : f32 to vector<8x128xf32>
    %7 = arith.addf %5, %6 : vector<8x128xf32>
    %cst_4 = arith.constant 0.000000e+00 : f32
    %8 = vector.broadcast %cst_4 : f32 to vector<8x128xf32>
    %9 = arith.maximumf %7, %8 : vector<8x128xf32>
    %c0_5 = arith.constant 0 : index
    %c0_6 = arith.constant 0 : index
    %10 = vector.load %arg4[%c0_5, %c0_6] : memref<128x1xf32, #tpu.memory_space<vmem>>, vector<128x1xf32>
    %cst_7 = arith.constant dense<0.000000e+00> : vector<8x1xf32>
    %11 = tpu.matmul %9, %10, %cst_7 {dimension_numbers = #tpu.dot_dimension_numbers<[1], [0], [0], [1], [0, 0, 1, 1], [], []>, precision = #tpu.contract_precision<fp32>} : vector<8x128xf32>, vector<128x1xf32>, vector<8x1xf32> -> vector<8x1xf32>
    %c0_8 = arith.constant 0 : index
    %c0_9 = arith.constant 0 : index
    %12 = vector.load %arg6[%c0_8, %c0_9] : memref<8x1xf32, #tpu.memory_space<vmem>>, vector<8x1xf32>
    %13 = arith.addf %12, %11 : vector<8x1xf32>
    %c0_10 = arith.constant 0 : index
    %c0_11 = arith.constant 0 : index
    %14 = vector.load %arg6[%c0_10, %c0_11] : memref<8x1xf32, #tpu.memory_space<vmem>>, vector<8x1xf32>
    tpu.vector_store %arg6[%c0_10, %c0_11], %13 {strides = array<i32>} : memref<8x1xf32, #tpu.memory_space<vmem>>, vector<8x1xf32>,
    %c0_i32_12 = arith.constant 0 : i32
    %15 = arith.cmpi eq, %arg1, %c0_i32_12 : i32
    %16 = arith.extui %15 : i1 to i32
    %c0_i32_13 = arith.constant 0 : i32
    %17 = arith.cmpi ne, %16, %c0_i32_13 : i32
    scf.if %17 {
      %c0_14 = arith.constant 0 : index
      %c0_15 = arith.constant 0 : index
      %18 = vector.load %arg6[%c0_14, %c0_15] : memref<8x1xf32, #tpu.memory_space<vmem>>, vector<8x1xf32>
      %19 = vector.shape_cast %18 : vector<8x1xf32> to vector<1x8x1xf32>
      %cst_16 = arith.constant dense<0.000000e+00> : vector<1xf32>
      %20 = vector.multi_reduction <add>, %19, %cst_16 [1, 2] : vector<1x8x1xf32> to vector<1xf32>
      %21 = vector.shape_cast %20 : vector<1xf32> to vector<1x1x1xf32>
      %22 = vector.extract %21[0, 0, 0] : f32 from vector<1x1x1xf32>
      %23 = vector.broadcast %22 : f32 to vector<1x128xf32>
      %c0_17 = arith.constant 0 : index
      %c0_18 = arith.constant 0 : index
      %24 = vector.load %arg5[%c0_17, %c0_18] : memref<1x128xf32, #tpu.memory_space<vmem>>, vector<1x128xf32>
      tpu.vector_store %arg5[%c0_17, %c0_18], %23 {strides = array<i32>} : memref<1x128xf32, #tpu.memory_space<vmem>>, vector<1x128xf32>,
    } else {
    }
    return
  }
  func.func @transform_0(%arg0: i32, %arg1: i32) -> (i32, i32) {
    %c1_i32 = arith.constant 1 : i32
    %0 = arith.muli %arg0, %c1_i32 : i32
    %1 = arith.addi %0, %arg1 : i32
    %c0_i32 = arith.constant 0 : i32
    %2 = arith.minsi %1, %c0_i32 : i32
    %c0_i32_0 = arith.constant 0 : i32
    %c0_i32_1 = arith.constant 0 : i32
    return %2, %c0_i32_0 : i32, i32
  }
  func.func @transform_1(%arg0: i32, %arg1: i32) -> (i32, i32) {
    %c1_i32 = arith.constant 1 : i32
    %0 = arith.muli %arg0, %c1_i32 : i32
    %1 = arith.addi %0, %arg1 : i32
    %c0_i32 = arith.constant 0 : i32
    %2 = arith.minsi %1, %c0_i32 : i32
    %c0_i32_0 = arith.constant 0 : i32
    %c0_i32_1 = arith.constant 0 : i32
    return %2, %c0_i32_0 : i32, i32
  }
  func.func @transform_2(%arg0: i32, %arg1: i32) -> (i32, i32) {
    %c0_i32 = arith.constant 0 : i32
    %c0_i32_0 = arith.constant 0 : i32
    %c0_i32_1 = arith.constant 0 : i32
    return %c0_i32, %c0_i32_0 : i32, i32
  }
  func.func @transform_3(%arg0: i32, %arg1: i32) -> (i32, i32) {
    %c0_i32 = arith.constant 0 : i32
    %c0_i32_0 = arith.constant 0 : i32
    return %c0_i32, %arg0 : i32, i32
  }
}

</mosaic_0001>

<llo_original>
// kernel: tpu_custom_call.1
$region0: #{tpu_custom_call.1}
  #allocation0 [shape = 'u32[]', space=smem, size = 0x4, offset = 0x4, fixed_abs, tag = 'smem constant byte address 0x4 - core index']
  #allocation1 [shape = 'u32[144,128]{1,0:T(1,128)}', space=vmem, size = 0x12000, scoped, tag = 'internal scratch']
  #allocation2 [shape = 'f32[8,1]{1,0:T(8,128)}', space=vmem, size = 0x1000, scoped, tag = 'scratch operand']
  %s0 = inlined_call_operand.vmem [shape: f32[8,128], index: 0, kind: input, shape index: {}]
  %s1 = inlined_call_operand.vmem [shape: f32[8,128], index: 1, kind: input, shape index: {}]
  %s2 = inlined_call_operand.vmem [shape: f32[128,1], index: 2, kind: input, shape index: {}]
  %s3 = inlined_call_operand.hbm [shape: f32[1,128], index: 3, kind: output, shape index: {}]
  %s4 = sld [smem:[#allocation0]]
  $region30: #{tpu_custom_call.1} parent=0
    _
  %s6 = ssub.s32 1, %s4
  %s7 = scalar_select 0, %s6, %s4
  $region1: #{tpu_custom_call.1} parent=0
    #allocation3 [shape = 'u8[512]{0}', space=vmem, size = 0x400, scoped, tag = 'output window, operand 0, single buffered']
    #allocation4 [shape = 's32[1]{0}', space=sflag, size = 0x4, scoped, tag = 'scoped memory for tpu_custom_call.1']
    %8 = vsyncpa [#allocation4], 0
    // Predicated region
    $region2: #{tpu_custom_call.1} parent=1 // pred_check
      _
    $region3: #{tpu_custom_call.1} parent=1 // pred_check_branch
      %10 = sbr.rel (0) target = $region5
    $region4: #{tpu_custom_call.1} parent=1 // pred_region
      %s11 = sadd.s32 0, 0
      %p12 = scmp.lt.s32.totalorder %s11, 0
      %s13 = scalar_select %p12, %s11, 0
      %p14 = scmp.lt.s32.totalorder %s13, 0
      %s15 = scalar_select %p14, %s13, 0
      %s16 = smul.addr %s15, 8
      %s17 = scalar_lea.vmem %s0, %s16
      %s18 = sadd.s32 0, 0
      %p19 = scmp.lt.s32.totalorder %s18, 0
      %s20 = scalar_select %p19, %s18, 0
    $region5: #{tpu_custom_call.1} parent=1 // pred_fallthru
      _
    // Predicated region
    $region6: #{tpu_custom_call.1} parent=1 // pred_check
      _
    $region7: #{tpu_custom_call.1} parent=1 // pred_check_branch
      %22 = sbr.rel (0) target = $region9
    $region8: #{tpu_custom_call.1} parent=1 // pred_region
      %s23 = sadd.s32 0, 0
      %p24 = scmp.lt.s32.totalorder %s23, 0
      %s25 = scalar_select %p24, %s23, 0
      %p26 = scmp.lt.s32.totalorder %s25, 0
      %s27 = scalar_select %p26, %s25, 0
      %s28 = smul.addr %s27, 8
      %s29 = scalar_lea.vmem %s1, %s28
      %s30 = sadd.s32 0, 0
      %p31 = scmp.lt.s32.totalorder %s30, 0
      %s32 = scalar_select %p31, %s30, 0
    $region9: #{tpu_custom_call.1} parent=1 // pred_fallthru
      _
    // Predicated region
    $region10: #{tpu_custom_call.1} parent=1 // pred_check
      _
    $region11: #{tpu_custom_call.1} parent=1 // pred_check_branch
      %34 = sbr.rel (0) target = $region13
    $region12: #{tpu_custom_call.1} parent=1 // pred_region
      _
    $region13: #{tpu_custom_call.1} parent=1 // pred_fallthru
      _
    %s35 = sadd.s32 0, 0
    %p36 = scmp.lt.s32.totalorder %s35, 0
    %s37 = scalar_select %p36, %s35, 0
    %p38 = scmp.lt.s32.totalorder %s37, 0
    %s39 = scalar_select %p38, %s37, 0
    %s40 = smul.addr %s39, 8
    %s41 = scalar_lea.vmem %s0, %s40
    %s42 = sadd.s32 0, 0
    %p43 = scmp.lt.s32.totalorder %s42, 0
    %s44 = scalar_select %p43, %s42, 0
    %p45 = scmp.lt.s32.totalorder %s44, 0
    %s46 = scalar_select %p45, %s44, 0
    %s47 = smul.addr %s46, 8
    %s48 = scalar_lea.vmem %s1, %s47
    %s49 = sadd.s32 0, 0
    %p50 = scmp.lt.s32.totalorder %s49, 0
    %s51 = scalar_select %p50, %s49, 0
    %p52 = scmp.lt.s32.totalorder %s51, 0
    %s53 = scalar_select %p52, %s51, 0
    %s54 = smul.addr %s53, 8
    %s55 = scalar_lea.vmem %s0, %s54
    %s56 = sadd.s32 0, 0
    %p57 = scmp.lt.s32.totalorder %s56, 0
    %s58 = scalar_select %p57, %s56, 0
    %s59 = sadd.s32 0, 0
    %p60 = scmp.lt.s32.totalorder %s59, 0
    %s61 = scalar_select %p60, %s59, 0
    %p62 = scmp.lt.s32.totalorder %s61, 0
    %s63 = scalar_select %p62, %s61, 0
    %s64 = smul.addr %s63, 8
    %s65 = scalar_lea.vmem %s1, %s64
    %s66 = sadd.s32 0, 0
    %p67 = scmp.lt.s32.totalorder %s66, 0
    %s68 = scalar_select %p67, %s66, 0
    %p69 = scmp.eq.s32.totalorder 0, 0
    // Predicated region
    $region14: #{tpu_custom_call.1} parent=1 // pred_check
      %p70 = pneg %p69
    $region15: #{tpu_custom_call.1} parent=1 // pred_check_branch
      %72 = sbr.rel (%p70) target = $region17
    $region16: #{tpu_custom_call.1} parent=1 // pred_region
      %vm73 = vcmask 7168
      %74 = vst.msk [vmem:[#allocation2] sm:$0xff] %vm73, 0.0
    $region17: #{tpu_custom_call.1} parent=1 // pred_fallthru
      _
    %v75 = vld [vmem:[%s55] sm:$0xff]
    %v76 = vld [vmem:[%s65] sm:$0xff]
    %v77 = vsub.f32 %v76, %v75
    %v78 = vadd.f32 %v77, 6.0
    %v79 = vmax.f32 %v78, 0.0
    %v80 = vld [vmem:[%s2] sm:$0xff]
    %v81 = vld [vmem:[%s2 + $0x8] sm:$0xff]
    %v82 = vld [vmem:[%s2 + $0x10] sm:$0xff]
    %v83 = vld [vmem:[%s2 + $0x18] sm:$0xff]
    %v84 = vld [vmem:[%s2 + $0x20] sm:$0xff]
    %v85 = vld [vmem:[%s2 + $0x28] sm:$0xff]
    %v86 = vld [vmem:[%s2 + $0x30] sm:$0xff]
    %v87 = vld [vmem:[%s2 + $0x38] sm:$0xff]
    %v88 = vld [vmem:[%s2 + $0x40] sm:$0xff]
    %v89 = vld [vmem:[%s2 + $0x48] sm:$0xff]
    %v90 = vld [vmem:[%s2 + $0x50] sm:$0xff]
    %v91 = vld [vmem:[%s2 + $0x58] sm:$0xff]
    %v92 = vld [vmem:[%s2 + $0x60] sm:$0xff]
    %v93 = vld [vmem:[%s2 + $0x68] sm:$0xff]
    %v94 = vld [vmem:[%s2 + $0x70] sm:$0xff]
    %v95 = vld [vmem:[%s2 + $0x78] sm:$0xff]
    %96 = vmatprep.subr.mxu0 0.0
    %v97 = vand.u32 %v80, 4294901760
    %98 = vmatpush1.msra.mxu0 %v97
    %99 = vmatprep.subr.mxu0 0.0
    %v100 = vand.u32 %v81, 4294901760
    %101 = vmatpush1.msra.mxu0 %v100
    %102 = vmatprep.subr.mxu0 0.0
    %v103 = vand.u32 %v82, 4294901760
    %104 = vmatpush1.msra.mxu0 %v103
    %105 = vmatprep.subr.mxu0 0.0
    %v106 = vand.u32 %v83, 4294901760
    %107 = vmatpush1.msra.mxu0 %v106
    %108 = vmatprep.subr.mxu0 0.0
    %v109 = vand.u32 %v84, 4294901760
    %110 = vmatpush1.msra.mxu0 %v109
    %111 = vmatprep.subr.mxu0 0.0
    %v112 = vand.u32 %v85, 4294901760
    %113 = vmatpush1.msra.mxu0 %v112
    %114 = vmatprep.subr.mxu0 0.0
    %v115 = vand.u32 %v86, 4294901760
    %116 = vmatpush1.msra.mxu0 %v115
    %117 = vmatprep.subr.mxu0 0.0
    %v118 = vand.u32 %v87, 4294901760
    %119 = vmatpush1.msra.mxu0 %v118
    %120 = vmatprep.subr.mxu0 0.0
    %v121 = vand.u32 %v88, 4294901760
    %122 = vmatpush1.msra.mxu0 %v121
    %123 = vmatprep.subr.mxu0 0.0
    %v124 = vand.u32 %v89, 4294901760
    %125 = vmatpush1.msra.mxu0 %v124
    %126 = vmatprep.subr.mxu0 0.0
    %v127 = vand.u32 %v90, 4294901760
    %128 = vmatpush1.msra.mxu0 %v127
    %129 = vmatprep.subr.mxu0 0.0
    %v130 = vand.u32 %v91, 4294901760
    %131 = vmatpush1.msra.mxu0 %v130
    %132 = vmatprep.subr.mxu0 0.0
    %v133 = vand.u32 %v92, 4294901760
    %134 = vmatpush1.msra.mxu0 %v133
    %135 = vmatprep.subr.mxu0 0.0
    %v136 = vand.u32 %v93, 4294901760
    %137 = vmatpush1.msra.mxu0 %v136
    %138 = vmatprep.subr.mxu0 0.0
    %v139 = vand.u32 %v94, 4294901760
    %140 = vmatpush1.msra.mxu0 %v139
    %141 = vmatprep.subr.mxu0 0.0
    %v142 = vand.u32 %v95, 4294901760
    %143 = vmatpush1.msra.mxu0 %v142
    %144 = vmatprep.subr.mxu0 0.0
    %145 = vmatpush1.msra.mxu0 0.0
    %146 = vmatprep.subr.mxu0 0.0
    %147 = vmatpush1.msra.mxu0 0.0
    %148 = vmatprep.subr.mxu0 0.0
    %149 = vmatpush1.msra.mxu0 0.0
    %150 = vmatprep.subr.mxu0 0.0
    %151 = vmatpush1.msra.mxu0 0.0
    %152 = vmatprep.subr.mxu0 0.0
    %153 = vmatpush1.msra.mxu0 0.0
    %154 = vmatprep.subr.mxu0 0.0
    %155 = vmatpush1.msra.mxu0 0.0
    %156 = vmatprep.subr.mxu0 0.0
    %157 = vmatpush1.msra.mxu0 0.0
    %158 = vmatprep.subr.mxu0 0.0
    %159 = vmatpush1.msra.mxu0 0.0
    %160 = vmatprep.subr.mxu0 0.0
    %161 = vmatpush1.msra.mxu0 0.0
    %162 = vmatprep.subr.mxu0 0.0
    %163 = vmatpush1.msra.mxu0 0.0
    %164 = vmatprep.subr.mxu0 0.0
    %165 = vmatpush1.msra.mxu0 0.0
    %166 = vmatprep.subr.mxu0 0.0
    %167 = vmatpush1.msra.mxu0 0.0
    %168 = vmatprep.subr.mxu0 0.0
    %169 = vmatpush1.msra.mxu0 0.0
    %170 = vmatprep.subr.mxu0 0.0
    %171 = vmatpush1.msra.mxu0 0.0
    %172 = vmatprep.subr.mxu0 0.0
    %173 = vmatpush1.msra.mxu0 0.0
    %174 = vmatprep.subr.mxu0 0.0
    %175 = vmatpush1.msra.mxu0 0.0
    %176 = vmatprep.mubr.f32.mxu0 0.0
    %v177 = vand.u32 %v79, 4294901760
    %v178 = vsub.f32 %v79, %v177
    %v179 = vand.u32 %v178, 4294901760
    %v180 = vsub.f32 %v178, %v179
    %v181 = vand.u32 %v180, 4294901760
    %182 = vmatmul.mubr.f32.gmra.mrb[0].mxu0 %v181
    %v183 = vpop.f32.mrb[0].mxu0
    %v184 = vadd.f32 0.0, %v183
    %v185 = vpop.f32.mrb[0].mxu0
    %186 = vdwg.mxu0
    %187 = vmatprep.subr.mxu0 0.0
    %v188 = vand.u32 %v80, 4294901760
    %v189 = vsub.f32 %v80, %v188
    %v190 = vand.u32 %v189, 4294901760
    %v191 = vsub.f32 %v189, %v190
    %v192 = vand.u32 %v191, 4294901760
    %193 = vmatpush1.msra.mxu0 %v192
    %194 = vmatprep.subr.mxu0 0.0
    %v195 = vand.u32 %v81, 4294901760
    %v196 = vsub.f32 %v81, %v195
    %v197 = vand.u32 %v196, 4294901760
    %v198 = vsub.f32 %v196, %v197
    %v199 = vand.u32 %v198, 4294901760
    %200 = vmatpush1.msra.mxu0 %v199
    %201 = vmatprep.subr.mxu0 0.0
    %v202 = vand.u32 %v82, 4294901760
    %v203 = vsub.f32 %v82, %v202
    %v204 = vand.u32 %v203, 4294901760
    %v205 = vsub.f32 %v203, %v204
    %v206 = vand.u32 %v205, 4294901760
    %207 = vmatpush1.msra.mxu0 %v206
    %208 = vmatprep.subr.mxu0 0.0
    %v209 = vand.u32 %v83, 4294901760
    %v210 = vsub.f32 %v83, %v209
    %v211 = vand.u32 %v210, 4294901760
    %v212 = vsub.f32 %v210, %v211
    %v213 = vand.u32 %v212, 4294901760
    %214 = vmatpush1.msra.mxu0 %v213
    %215 = vmatprep.subr.mxu0 0.0
    %v216 = vand.u32 %v84, 4294901760
    %v217 = vsub.f32 %v84, %v216
    %v218 = vand.u32 %v217, 4294901760
    %v219 = vsub.f32 %v217, %v218
    %v220 = vand.u32 %v219, 4294901760
    %221 = vmatpush1.msra.mxu0 %v220
    %222 = vmatprep.subr.mxu0 0.0
    %v223 = vand.u32 %v85, 4294901760
    %v224 = vsub.f32 %v85, %v223
    %v225 = vand.u32 %v224, 4294901760
    %v226 = vsub.f32 %v224, %v225
    %v227 = vand.u32 %v226, 4294901760
    %228 = vmatpush1.msra.mxu0 %v227
    %229 = vmatprep.subr.mxu0 0.0
    %v230 = vand.u32 %v86, 4294901760
    %v231 = vsub.f32 %v86, %v230
    %v232 = vand.u32 %v231, 4294901760
    %v233 = vsub.f32 %v231, %v232
    %v234 = vand.u32 %v233, 4294901760
    %235 = vmatpush1.msra.mxu0 %v234
    %236 = vmatprep.subr.mxu0 0.0
    %v237 = vand.u32 %v87, 4294901760
    %v238 = vsub.f32 %v87, %v237
    %v239 = vand.u32 %v238, 4294901760
    %v240 = vsub.f32 %v238, %v239
    %v241 = vand.u32 %v240, 4294901760
    %242 = vmatpush1.msra.mxu0 %v241
    %243 = vmatprep.subr.mxu0 0.0
    %v244 = vand.u32 %v88, 4294901760
    %v245 = vsub.f32 %v88, %v244
    %v246 = vand.u32 %v245, 4294901760
    %v247 = vsub.f32 %v245, %v246
    %v248 = vand.u32 %v247, 4294901760
    %249 = vmatpush1.msra.mxu0 %v248
    %250 = vmatprep.subr.mxu0 0.0
    %v251 = vand.u32 %v89, 4294901760
    %v252 = vsub.f32 %v89, %v251
    %v253 = vand.u32 %v252, 4294901760
    %v254 = vsub.f32 %v252, %v253
    %v255 = vand.u32 %v254, 4294901760
    %256 = vmatpush1.msra.mxu0 %v255
    %257 = vmatprep.subr.mxu0 0.0
    %v258 = vand.u32 %v90, 4294901760
    %v259 = vsub.f32 %v90, %v258
    %v260 = vand.u32 %v259, 4294901760
    %v261 = vsub.f32 %v259, %v260
    %v262 = vand.u32 %v261, 4294901760
    %263 = vmatpush1.msra.mxu0 %v262
    %264 = vmatprep.subr.mxu0 0.0
    %v265 = vand.u32 %v91, 4294901760
    %v266 = vsub.f32 %v91, %v265
    %v267 = vand.u32 %v266, 4294901760
    %v268 = vsub.f32 %v266, %v267
    %v269 = vand.u32 %v268, 4294901760
    %270 = vmatpush1.msra.mxu0 %v269
    %271 = vmatprep.subr.mxu0 0.0
    %v272 = vand.u32 %v92, 4294901760
    %v273 = vsub.f32 %v92, %v272
    %v274 = vand.u32 %v273, 4294901760
    %v275 = vsub.f32 %v273, %v274
    %v276 = vand.u32 %v275, 4294901760
    %277 = vmatpush1.msra.mxu0 %v276
    %278 = vmatprep.subr.mxu0 0.0
    %v279 = vand.u32 %v93, 4294901760
    %v280 = vsub.f32 %v93, %v279
    %v281 = vand.u32 %v280, 4294901760
    %v282 = vsub.f32 %v280, %v281
    %v283 = vand.u32 %v282, 4294901760
    %284 = vmatpush1.msra.mxu0 %v283
    %285 = vmatprep.subr.mxu0 0.0
    %v286 = vand.u32 %v94, 4294901760
    %v287 = vsub.f32 %v94, %v286
    %v288 = vand.u32 %v287, 4294901760
    %v289 = vsub.f32 %v287, %v288
    %v290 = vand.u32 %v289, 4294901760
    %291 = vmatpush1.msra.mxu0 %v290
    %292 = vmatprep.subr.mxu0 0.0
    %v293 = vand.u32 %v95, 4294901760
    %v294 = vsub.f32 %v95, %v293
    %v295 = vand.u32 %v294, 4294901760
    %v296 = vsub.f32 %v294, %v295
    %v297 = vand.u32 %v296, 4294901760
    %298 = vmatpush1.msra.mxu0 %v297
    %299 = vmatprep.subr.mxu0 0.0
    %300 = vmatpush1.msra.mxu0 0.0
    %301 = vmatprep.subr.mxu0 0.0
    %302 = vmatpush1.msra.mxu0 0.0
    %303 = vmatprep.subr.mxu0 0.0
    %304 = vmatpush1.msra.mxu0 0.0
    %305 = vmatprep.subr.mxu0 0.0
    %306 = vmatpush1.msra.mxu0 0.0
    %307 = vmatprep.subr.mxu0 0.0
    %308 = vmatpush1.msra.mxu0 0.0
    %309 = vmatprep.subr.mxu0 0.0
    %310 = vmatpush1.msra.mxu0 0.0
    %311 = vmatprep.subr.mxu0 0.0
    %312 = vmatpush1.msra.mxu0 0.0
    %313 = vmatprep.subr.mxu0 0.0
    %314 = vmatpush1.msra.mxu0 0.0
    %315 = vmatprep.subr.mxu0 0.0
    %316 = vmatpush1.msra.mxu0 0.0
    %317 = vmatprep.subr.mxu0 0.0
    %318 = vmatpush1.msra.mxu0 0.0
    %319 = vmatprep.subr.mxu0 0.0
    %320 = vmatpush1.msra.mxu0 0.0
    %321 = vmatprep.subr.mxu0 0.0
    %322 = vmatpush1.msra.mxu0 0.0
    %323 = vmatprep.subr.mxu0 0.0
    %324 = vmatpush1.msra.mxu0 0.0
    %325 = vmatprep.subr.mxu0 0.0
    %326 = vmatpush1.msra.mxu0 0.0
    %327 = vmatprep.subr.mxu0 0.0
    %328 = vmatpush1.msra.mxu0 0.0
    %329 = vmatprep.subr.mxu0 0.0
    %330 = vmatpush1.msra.mxu0 0.0
    %331 = vmatprep.mubr.f32.mxu0 0.0
    %v332 = vand.u32 %v79, 4294901760
    %333 = vmatmul.mubr.f32.gmra.mrb[0].mxu0 %v332
    %v334 = vpop.f32.mrb[0].mxu0
    %v335 = vadd.f32 %v184, %v334
    %v336 = vpop.f32.mrb[0].mxu0
    %337 = vdwg.mxu0
    %338 = vmatprep.subr.mxu0 0.0
    %v339 = vand.u32 %v80, 4294901760
    %v340 = vsub.f32 %v80, %v339
    %341 = vmatpush1.msra.mxu0 %v340
    %342 = vmatprep.subr.mxu0 0.0
    %v343 = vand.u32 %v81, 4294901760
    %v344 = vsub.f32 %v81, %v343
    %345 = vmatpush1.msra.mxu0 %v344
    %346 = vmatprep.subr.mxu0 0.0
    %v347 = vand.u32 %v82, 4294901760
    %v348 = vsub.f32 %v82, %v347
    %349 = vmatpush1.msra.mxu0 %v348
    %350 = vmatprep.subr.mxu0 0.0
    %v351 = vand.u32 %v83, 4294901760
    %v352 = vsub.f32 %v83, %v351
    %353 = vmatpush1.msra.mxu0 %v352
    %354 = vmatprep.subr.mxu0 0.0
    %v355 = vand.u32 %v84, 4294901760
    %v356 = vsub.f32 %v84, %v355
    %357 = vmatpush1.msra.mxu0 %v356
    %358 = vmatprep.subr.mxu0 0.0
    %v359 = vand.u32 %v85, 4294901760
    %v360 = vsub.f32 %v85, %v359
    %361 = vmatpush1.msra.mxu0 %v360
    %362 = vmatprep.subr.mxu0 0.0
    %v363 = vand.u32 %v86, 4294901760
    %v364 = vsub.f32 %v86, %v363
    %365 = vmatpush1.msra.mxu0 %v364
    %366 = vmatprep.subr.mxu0 0.0
    %v367 = vand.u32 %v87, 4294901760
    %v368 = vsub.f32 %v87, %v367
    %369 = vmatpush1.msra.mxu0 %v368
    %370 = vmatprep.subr.mxu0 0.0
    %v371 = vand.u32 %v88, 4294901760
    %v372 = vsub.f32 %v88, %v371
    %373 = vmatpush1.msra.mxu0 %v372
    %374 = vmatprep.subr.mxu0 0.0
    %v375 = vand.u32 %v89, 4294901760
    %v376 = vsub.f32 %v89, %v375
    %377 = vmatpush1.msra.mxu0 %v376
    %378 = vmatprep.subr.mxu0 0.0
    %v379 = vand.u32 %v90, 4294901760
    %v380 = vsub.f32 %v90, %v379
    %381 = vmatpush1.msra.mxu0 %v380
    %382 = vmatprep.subr.mxu0 0.0
    %v383 = vand.u32 %v91, 4294901760
    %v384 = vsub.f32 %v91, %v383
    %385 = vmatpush1.msra.mxu0 %v384
    %386 = vmatprep.subr.mxu0 0.0
    %v387 = vand.u32 %v92, 4294901760
    %v388 = vsub.f32 %v92, %v387
    %389 = vmatpush1.msra.mxu0 %v388
    %390 = vmatprep.subr.mxu0 0.0
    %v391 = vand.u32 %v93, 4294901760
    %v392 = vsub.f32 %v93, %v391
    %393 = vmatpush1.msra.mxu0 %v392
    %394 = vmatprep.subr.mxu0 0.0
    %v395 = vand.u32 %v94, 4294901760
    %v396 = vsub.f32 %v94, %v395
    %397 = vmatpush1.msra.mxu0 %v396
    %398 = vmatprep.subr.mxu0 0.0
    %v399 = vand.u32 %v95, 4294901760
    %v400 = vsub.f32 %v95, %v399
    %401 = vmatpush1.msra.mxu0 %v400
    %402 = vmatprep.subr.mxu0 0.0
    %403 = vmatpush1.msra.mxu0 0.0
    %404 = vmatprep.subr.mxu0 0.0
    %405 = vmatpush1.msra.mxu0 0.0
    %406 = vmatprep.subr.mxu0 0.0
    %407 = vmatpush1.msra.mxu0 0.0
    %408 = vmatprep.subr.mxu0 0.0
    %409 = vmatpush1.msra.mxu0 0.0
    %410 = vmatprep.subr.mxu0 0.0
    %411 = vmatpush1.msra.mxu0 0.0
    %412 = vmatprep.subr.mxu0 0.0
    %413 = vmatpush1.msra.mxu0 0.0
    %414 = vmatprep.subr.mxu0 0.0
    %415 = vmatpush1.msra.mxu0 0.0
    %416 = vmatprep.subr.mxu0 0.0
    %417 = vmatpush1.msra.mxu0 0.0
    %418 = vmatprep.subr.mxu0 0.0
    %419 = vmatpush1.msra.mxu0 0.0
    %420 = vmatprep.subr.mxu0 0.0
    %421 = vmatpush1.msra.mxu0 0.0
    %422 = vmatprep.subr.mxu0 0.0
    %423 = vmatpush1.msra.mxu0 0.0
    %424 = vmatprep.subr.mxu0 0.0
    %425 = vmatpush1.msra.mxu0 0.0
    %426 = vmatprep.subr.mxu0 0.0
    %427 = vmatpush1.msra.mxu0 0.0
    %428 = vmatprep.subr.mxu0 0.0
    %429 = vmatpush1.msra.mxu0 0.0
    %430 = vmatprep.subr.mxu0 0.0
    %431 = vmatpush1.msra.mxu0 0.0
    %432 = vmatprep.subr.mxu0 0.0
    %433 = vmatpush1.msra.mxu0 0.0
    %434 = vmatprep.mubr.f32.mxu0 0.0
    %v435 = vand.u32 %v79, 4294901760
    %v436 = vsub.f32 %v79, %v435
    %437 = vmatmul.mubr.f32.gmra.mrb[0].mxu0 %v436
    %v438 = vpop.f32.mrb[0].mxu0
    %v439 = vadd.f32 %v335, %v438
    %v440 = vpop.f32.mrb[0].mxu0
    %441 = vdwg.mxu0
    %442 = vmatprep.subr.mxu0 0.0
    %v443 = vand.u32 %v80, 4294901760
    %444 = vmatpush1.msra.mxu0 %v443
    %445 = vmatprep.subr.mxu0 0.0
    %v446 = vand.u32 %v81, 4294901760
    %447 = vmatpush1.msra.mxu0 %v446
    %448 = vmatprep.subr.mxu0 0.0
    %v449 = vand.u32 %v82, 4294901760
    %450 = vmatpush1.msra.mxu0 %v449
    %451 = vmatprep.subr.mxu0 0.0
    %v452 = vand.u32 %v83, 4294901760
    %453 = vmatpush1.msra.mxu0 %v452
    %454 = vmatprep.subr.mxu0 0.0
    %v455 = vand.u32 %v84, 4294901760
    %456 = vmatpush1.msra.mxu0 %v455
    %457 = vmatprep.subr.mxu0 0.0
    %v458 = vand.u32 %v85, 4294901760
    %459 = vmatpush1.msra.mxu0 %v458
    %460 = vmatprep.subr.mxu0 0.0
    %v461 = vand.u32 %v86, 4294901760
    %462 = vmatpush1.msra.mxu0 %v461
    %463 = vmatprep.subr.mxu0 0.0
    %v464 = vand.u32 %v87, 4294901760
    %465 = vmatpush1.msra.mxu0 %v464
    %466 = vmatprep.subr.mxu0 0.0
    %v467 = vand.u32 %v88, 4294901760
    %468 = vmatpush1.msra.mxu0 %v467
    %469 = vmatprep.subr.mxu0 0.0
    %v470 = vand.u32 %v89, 4294901760
    %471 = vmatpush1.msra.mxu0 %v470
    %472 = vmatprep.subr.mxu0 0.0
    %v473 = vand.u32 %v90, 4294901760
    %474 = vmatpush1.msra.mxu0 %v473
    %475 = vmatprep.subr.mxu0 0.0
    %v476 = vand.u32 %v91, 4294901760
    %477 = vmatpush1.msra.mxu0 %v476
    %478 = vmatprep.subr.mxu0 0.0
    %v479 = vand.u32 %v92, 4294901760
    %480 = vmatpush1.msra.mxu0 %v479
    %481 = vmatprep.subr.mxu0 0.0
    %v482 = vand.u32 %v93, 4294901760
    %483 = vmatpush1.msra.mxu0 %v482
    %484 = vmatprep.subr.mxu0 0.0
    %v485 = vand.u32 %v94, 4294901760
    %486 = vmatpush1.msra.mxu0 %v485
    %487 = vmatprep.subr.mxu0 0.0
    %v488 = vand.u32 %v95, 4294901760
    %489 = vmatpush1.msra.mxu0 %v488
    %490 = vmatprep.subr.mxu0 0.0
    %491 = vmatpush1.msra.mxu0 0.0
    %492 = vmatprep.subr.mxu0 0.0
    %493 = vmatpush1.msra.mxu0 0.0
    %494 = vmatprep.subr.mxu0 0.0
    %495 = vmatpush1.msra.mxu0 0.0
    %496 = vmatprep.subr.mxu0 0.0
    %497 = vmatpush1.msra.mxu0 0.0
    %498 = vmatprep.subr.mxu0 0.0
    %499 = vmatpush1.msra.mxu0 0.0
    %500 = vmatprep.subr.mxu0 0.0
    %501 = vmatpush1.msra.mxu0 0.0
    %502 = vmatprep.subr.mxu0 0.0
    %503 = vmatpush1.msra.mxu0 0.0
    %504 = vmatprep.subr.mxu0 0.0
    %505 = vmatpush1.msra.mxu0 0.0
    %506 = vmatprep.subr.mxu0 0.0
    %507 = vmatpush1.msra.mxu0 0.0
    %508 = vmatprep.subr.mxu0 0.0
    %509 = vmatpush1.msra.mxu0 0.0
    %510 = vmatprep.subr.mxu0 0.0
    %511 = vmatpush1.msra.mxu0 0.0
    %512 = vmatprep.subr.mxu0 0.0
    %513 = vmatpush1.msra.mxu0 0.0
    %514 = vmatprep.subr.mxu0 0.0
    %515 = vmatpush1.msra.mxu0 0.0
    %516 = vmatprep.subr.mxu0 0.0
    %517 = vmatpush1.msra.mxu0 0.0
    %518 = vmatprep.subr.mxu0 0.0
    %519 = vmatpush1.msra.mxu0 0.0
    %520 = vmatprep.subr.mxu0 0.0
    %521 = vmatpush1.msra.mxu0 0.0
    %522 = vmatprep.mubr.f32.mxu0 0.0
    %v523 = vand.u32 %v79, 4294901760
    %v524 = vsub.f32 %v79, %v523
    %v525 = vand.u32 %v524, 4294901760
    %526 = vmatmul.mubr.f32.gmra.mrb[0].mxu0 %v525
    %v527 = vpop.f32.mrb[0].mxu0
    %v528 = vadd.f32 %v439, %v527
    %v529 = vpop.f32.mrb[0].mxu0
    %530 = vdwg.mxu0
    %531 = vmatprep.subr.mxu0 0.0
    %v532 = vand.u32 %v80, 4294901760
    %v533 = vsub.f32 %v80, %v532
    %v534 = vand.u32 %v533, 4294901760
    %535 = vmatpush1.msra.mxu0 %v534
    %536 = vmatprep.subr.mxu0 0.0
    %v537 = vand.u32 %v81, 4294901760
    %v538 = vsub.f32 %v81, %v537
    %v539 = vand.u32 %v538, 4294901760
    %540 = vmatpush1.msra.mxu0 %v539
    %541 = vmatprep.subr.mxu0 0.0
    %v542 = vand.u32 %v82, 4294901760
    %v543 = vsub.f32 %v82, %v542
    %v544 = vand.u32 %v543, 4294901760
    %545 = vmatpush1.msra.mxu0 %v544
    %546 = vmatprep.subr.mxu0 0.0
    %v547 = vand.u32 %v83, 4294901760
    %v548 = vsub.f32 %v83, %v547
    %v549 = vand.u32 %v548, 4294901760
    %550 = vmatpush1.msra.mxu0 %v549
    %551 = vmatprep.subr.mxu0 0.0
    %v552 = vand.u32 %v84, 4294901760
    %v553 = vsub.f32 %v84, %v552
    %v554 = vand.u32 %v553, 4294901760
    %555 = vmatpush1.msra.mxu0 %v554
    %556 = vmatprep.subr.mxu0 0.0
    %v557 = vand.u32 %v85, 4294901760
    %v558 = vsub.f32 %v85, %v557
    %v559 = vand.u32 %v558, 4294901760
    %560 = vmatpush1.msra.mxu0 %v559
    %561 = vmatprep.subr.mxu0 0.0
    %v562 = vand.u32 %v86, 4294901760
    %v563 = vsub.f32 %v86, %v562
    %v564 = vand.u32 %v563, 4294901760
    %565 = vmatpush1.msra.mxu0 %v564
    %566 = vmatprep.subr.mxu0 0.0
    %v567 = vand.u32 %v87, 4294901760
    %v568 = vsub.f32 %v87, %v567
    %v569 = vand.u32 %v568, 4294901760
    %570 = vmatpush1.msra.mxu0 %v569
    %571 = vmatprep.subr.mxu0 0.0
    %v572 = vand.u32 %v88, 4294901760
    %v573 = vsub.f32 %v88, %v572
    %v574 = vand.u32 %v573, 4294901760
    %575 = vmatpush1.msra.mxu0 %v574
    %576 = vmatprep.subr.mxu0 0.0
    %v577 = vand.u32 %v89, 4294901760
    %v578 = vsub.f32 %v89, %v577
    %v579 = vand.u32 %v578, 4294901760
    %580 = vmatpush1.msra.mxu0 %v579
    %581 = vmatprep.subr.mxu0 0.0
    %v582 = vand.u32 %v90, 4294901760
    %v583 = vsub.f32 %v90, %v582
    %v584 = vand.u32 %v583, 4294901760
    %585 = vmatpush1.msra.mxu0 %v584
    %586 = vmatprep.subr.mxu0 0.0
    %v587 = vand.u32 %v91, 4294901760
    %v588 = vsub.f32 %v91, %v587
    %v589 = vand.u32 %v588, 4294901760
    %590 = vmatpush1.msra.mxu0 %v589
    %591 = vmatprep.subr.mxu0 0.0
    %v592 = vand.u32 %v92, 4294901760
    %v593 = vsub.f32 %v92, %v592
    %v594 = vand.u32 %v593, 4294901760
    %595 = vmatpush1.msra.mxu0 %v594
    %596 = vmatprep.subr.mxu0 0.0
    %v597 = vand.u32 %v93, 4294901760
    %v598 = vsub.f32 %v93, %v597
    %v599 = vand.u32 %v598, 4294901760
    %600 = vmatpush1.msra.mxu0 %v599
    %601 = vmatprep.subr.mxu0 0.0
    %v602 = vand.u32 %v94, 4294901760
    %v603 = vsub.f32 %v94, %v602
    %v604 = vand.u32 %v603, 4294901760
    %605 = vmatpush1.msra.mxu0 %v604
    %606 = vmatprep.subr.mxu0 0.0
    %v607 = vand.u32 %v95, 4294901760
    %v608 = vsub.f32 %v95, %v607
    %v609 = vand.u32 %v608, 4294901760
    %610 = vmatpush1.msra.mxu0 %v609
    %611 = vmatprep.subr.mxu0 0.0
    %612 = vmatpush1.msra.mxu0 0.0
    %613 = vmatprep.subr.mxu0 0.0
    %614 = vmatpush1.msra.mxu0 0.0
    %615 = vmatprep.subr.mxu0 0.0
    %616 = vmatpush1.msra.mxu0 0.0
    %617 = vmatprep.subr.mxu0 0.0
    %618 = vmatpush1.msra.mxu0 0.0
    %619 = vmatprep.subr.mxu0 0.0
    %620 = vmatpush1.msra.mxu0 0.0
    %621 = vmatprep.subr.mxu0 0.0
    %622 = vmatpush1.msra.mxu0 0.0
    %623 = vmatprep.subr.mxu0 0.0
    %624 = vmatpush1.msra.mxu0 0.0
    %625 = vmatprep.subr.mxu0 0.0
    %626 = vmatpush1.msra.mxu0 0.0
    %627 = vmatprep.subr.mxu0 0.0
    %628 = vmatpush1.msra.mxu0 0.0
    %629 = vmatprep.subr.mxu0 0.0
    %630 = vmatpush1.msra.mxu0 0.0
    %631 = vmatprep.subr.mxu0 0.0
    %632 = vmatpush1.msra.mxu0 0.0
    %633 = vmatprep.subr.mxu0 0.0
    %634 = vmatpush1.msra.mxu0 0.0
    %635 = vmatprep.subr.mxu0 0.0
    %636 = vmatpush1.msra.mxu0 0.0
    %637 = vmatprep.subr.mxu0 0.0
    %638 = vmatpush1.msra.mxu0 0.0
    %639 = vmatprep.subr.mxu0 0.0
    %640 = vmatpush1.msra.mxu0 0.0
    %641 = vmatprep.subr.mxu0 0.0
    %642 = vmatpush1.msra.mxu0 0.0
    %643 = vmatprep.mubr.f32.mxu0 0.0
    %v644 = vand.u32 %v79, 4294901760
    %645 = vmatmul.mubr.f32.gmra.mrb[0].mxu0 %v644
    %v646 = vpop.f32.mrb[0].mxu0
    %v647 = vadd.f32 %v528, %v646
    %v648 = vpop.f32.mrb[0].mxu0
    %649 = vdwg.mxu0
    %650 = vmatprep.subr.mxu0 0.0
    %v651 = vand.u32 %v80, 4294901760
    %652 = vmatpush1.msra.mxu0 %v651
    %653 = vmatprep.subr.mxu0 0.0
    %v654 = vand.u32 %v81, 4294901760
    %655 = vmatpush1.msra.mxu0 %v654
    %656 = vmatprep.subr.mxu0 0.0
    %v657 = vand.u32 %v82, 4294901760
    %658 = vmatpush1.msra.mxu0 %v657
    %659 = vmatprep.subr.mxu0 0.0
    %v660 = vand.u32 %v83, 4294901760
    %661 = vmatpush1.msra.mxu0 %v660
    %662 = vmatprep.subr.mxu0 0.0
    %v663 = vand.u32 %v84, 4294901760
    %664 = vmatpush1.msra.mxu0 %v663
    %665 = vmatprep.subr.mxu0 0.0
    %v666 = vand.u32 %v85, 4294901760
    %667 = vmatpush1.msra.mxu0 %v666
    %668 = vmatprep.subr.mxu0 0.0
    %v669 = vand.u32 %v86, 4294901760
    %670 = vmatpush1.msra.mxu0 %v669
    %671 = vmatprep.subr.mxu0 0.0
    %v672 = vand.u32 %v87, 4294901760
    %673 = vmatpush1.msra.mxu0 %v672
    %674 = vmatprep.subr.mxu0 0.0
    %v675 = vand.u32 %v88, 4294901760
    %676 = vmatpush1.msra.mxu0 %v675
    %677 = vmatprep.subr.mxu0 0.0
    %v678 = vand.u32 %v89, 4294901760
    %679 = vmatpush1.msra.mxu0 %v678
    %680 = vmatprep.subr.mxu0 0.0
    %v681 = vand.u32 %v90, 4294901760
    %682 = vmatpush1.msra.mxu0 %v681
    %683 = vmatprep.subr.mxu0 0.0
    %v684 = vand.u32 %v91, 4294901760
    %685 = vmatpush1.msra.mxu0 %v684
    %686 = vmatprep.subr.mxu0 0.0
    %v687 = vand.u32 %v92, 4294901760
    %688 = vmatpush1.msra.mxu0 %v687
    %689 = vmatprep.subr.mxu0 0.0
    %v690 = vand.u32 %v93, 4294901760
    %691 = vmatpush1.msra.mxu0 %v690
    %692 = vmatprep.subr.mxu0 0.0
    %v693 = vand.u32 %v94, 4294901760
    %694 = vmatpush1.msra.mxu0 %v693
    %695 = vmatprep.subr.mxu0 0.0
    %v696 = vand.u32 %v95, 4294901760
    %697 = vmatpush1.msra.mxu0 %v696
    %698 = vmatprep.subr.mxu0 0.0
    %699 = vmatpush1.msra.mxu0 0.0
    %700 = vmatprep.subr.mxu0 0.0
    %701 = vmatpush1.msra.mxu0 0.0
    %702 = vmatprep.subr.mxu0 0.0
    %703 = vmatpush1.msra.mxu0 0.0
    %704 = vmatprep.subr.mxu0 0.0
    %705 = vmatpush1.msra.mxu0 0.0
    %706 = vmatprep.subr.mxu0 0.0
    %707 = vmatpush1.msra.mxu0 0.0
    %708 = vmatprep.subr.mxu0 0.0
    %709 = vmatpush1.msra.mxu0 0.0
    %710 = vmatprep.subr.mxu0 0.0
    %711 = vmatpush1.msra.mxu0 0.0
    %712 = vmatprep.subr.mxu0 0.0
    %713 = vmatpush1.msra.mxu0 0.0
    %714 = vmatprep.subr.mxu0 0.0
    %715 = vmatpush1.msra.mxu0 0.0
    %716 = vmatprep.subr.mxu0 0.0
    %717 = vmatpush1.msra.mxu0 0.0
    %718 = vmatprep.subr.mxu0 0.0
    %719 = vmatpush1.msra.mxu0 0.0
    %720 = vmatprep.subr.mxu0 0.0
    %721 = vmatpush1.msra.mxu0 0.0
    %722 = vmatprep.subr.mxu0 0.0
    %723 = vmatpush1.msra.mxu0 0.0
    %724 = vmatprep.subr.mxu0 0.0
    %725 = vmatpush1.msra.mxu0 0.0
    %726 = vmatprep.subr.mxu0 0.0
    %727 = vmatpush1.msra.mxu0 0.0
    %728 = vmatprep.subr.mxu0 0.0
    %729 = vmatpush1.msra.mxu0 0.0
    %730 = vmatprep.mubr.f32.mxu0 0.0
    %v731 = vand.u32 %v79, 4294901760
    %732 = vmatmul.mubr.f32.gmra.mrb[0].mxu0 %v731
    %v733 = vpop.f32.mrb[0].mxu0
    %v734 = vadd.f32 %v647, %v733
    %v735 = vpop.f32.mrb[0].mxu0
    %736 = vdwg.mxu0
    %v737 = vld [vmem:[#allocation2] sm:$0xff]
    %v738 = vadd.f32 %v737, %v734
    %vm739 = vcmask 7168
    %740 = vst.msk [vmem:[#allocation2] sm:$0xff] %vm739, %v738
    // Predicated region
    $region18: #{tpu_custom_call.1} parent=1 // pred_check
      %p741 = pneg %p69
    $region19: #{tpu_custom_call.1} parent=1 // pred_check_branch
      %743 = sbr.rel (%p741) target = $region21
    $region20: #{tpu_custom_call.1} parent=1 // pred_region
      %v744 = vld [vmem:[#allocation2] sm:$0xff]
      %v745 = vsel %vm739, %v744, 0.0
      %746 = vadd.xlane.f32.xlu0 %v745
      %v747 = vpop.xlane.xlu0 %746
      %v748 = vrot.slane %v747, 4
      %v749 = vadd.f32 %v747, %v748
      %v750 = vrot.slane %v749, 2
      %v751 = vadd.f32 %v749, %v750
      %v752 = vrot.slane %v751, 1
      %v753 = vadd.f32 %v751, %v752
      %s754 = vtos %v753
      %v755 = vstv %s754
      %756 = vst [vmem:[#allocation3] sm:$0x1] %v755
    $region21: #{tpu_custom_call.1} parent=1 // pred_fallthru
      _
    // Predicated region
    $region22: #{tpu_custom_call.1} parent=1 // pred_check
      _
    $region23: #{tpu_custom_call.1} parent=1 // pred_check_branch
      %758 = sbr.rel (0) target = $region25
    $region24: #{tpu_custom_call.1} parent=1 // pred_region
      %s760 = ssub.s32 16, 16
      %761 = vsyncadd [#allocation4], %s760
      %s763 = sshll.u32 [#allocation3], 4
      %s764 = int_to_ptr.vmem [resolvable:$true] %s763
      %766 = dma.vmem_to_hbm [thread:$0]  %s764, 16, %s3, [#allocation4]
    $region25: #{tpu_custom_call.1} parent=1 // pred_fallthru
      _
    // Predicated region
    $region26: #{tpu_custom_call.1} parent=1 // pred_check
      _
    $region27: #{tpu_custom_call.1} parent=1 // pred_check_branch
      %768 = sbr.rel (0) target = $region29
    $region28: #{tpu_custom_call.1} parent=1 // pred_region
      %769 = dma.done [#allocation4], 16
    $region29: #{tpu_custom_call.1} parent=1 // pred_fallthru
      _
    %770 = vsyncpa [#allocation4], 1

</llo_original>
